<compile_context>
chip_gen: v6e
topology: v6e:2x2x1
jax: 0.10.0
libtpu: 0.0.40
codegen_flags: <defaults>
</compile_context>

<pallas_src>
import functools

import jax
import jax.numpy as jnp
from jax.experimental import pallas as pl
from jax.experimental.pallas import tpu as pltpu

LN_EPS = 1e-5


def _round_up(a, b):
    return (a + b - 1) // b * b


def _erf(x):
    # Abramowitz & Stegun 7.1.26 rational approximation (|err| < 1.5e-7),
    # built only from ops guaranteed to lower in Mosaic.
    a1, a2, a3, a4, a5 = 0.254829592, -0.284496736, 1.421413741, -1.453152027, 1.061405429
    p = 0.3275911
    sign = jnp.where(x < 0.0, -1.0, 1.0)
    ax = jnp.abs(x)
    # EUP approximate reciprocal (separate VLIW slot -> essentially free).
    t = pl.reciprocal(1.0 + p * ax, approx=True)
    poly = ((((a5 * t + a4) * t + a3) * t + a2) * t + a1) * t
    y = 1.0 - poly * jnp.exp(-ax * ax)
    return sign * y


def _gelu_exact(x):
    # PyTorch nn.GELU() default (approximate='none'): 0.5*x*(1+erf(x/sqrt(2)))
    return 0.5 * x * (1.0 + _erf(x * 0.7071067811865476))


def ffn_kernel(x_ref, g_ref, beta_ref, w1_ref, b1_ref, w2_ref, b2_ref, o_ref,
               xn_ref, acc_ref, *, inv_dim):
    k = pl.program_id(1)

    # ---- Phase 0 (first hidden tile): LayerNorm once, cache xn, zero acc ----
    @pl.when(k == 0)
    def _():
        x = x_ref[...].astype(jnp.float32)
        # Feature dim may be zero-padded to a multiple of 128; padded lanes of
        # x / gamma / beta are zero, so sums are exact and we divide by the
        # true dim (inv_dim).  Padded lanes of xn end up exactly zero.
        mean = jnp.sum(x, axis=-1, keepdims=True) * inv_dim
        ex2 = jnp.sum(x * x, axis=-1, keepdims=True) * inv_dim
        var = jnp.maximum(ex2 - mean * mean, 0.0)
        xhat = (x - mean) * jax.lax.rsqrt(var + LN_EPS)
        xn = xhat * g_ref[...].astype(jnp.float32) + beta_ref[...].astype(jnp.float32)
        xn_ref[...] = xn.astype(xn_ref.dtype)
        acc_ref[...] = jnp.zeros_like(acc_ref)

    # ---- Linear(dim -> tile_h) on the MXU (bf16 operands, f32 accumulate) ----
    h = jnp.dot(xn_ref[...], w1_ref[...], preferred_element_type=jnp.float32)
    h = h + b1_ref[...].astype(jnp.float32)

    # ---- GELU (exact, erf form) in f32 on the VPU/EUP ----
    h = _gelu_exact(h)

    # ---- Linear(tile_h -> dim), accumulated over hidden tiles ----
    acc_ref[...] += jnp.dot(h.astype(w2_ref.dtype), w2_ref[...],
                            preferred_element_type=jnp.float32)

    # ---- Finalize on the last hidden tile ----
    @pl.when(k == pl.num_programs(1) - 1)
    def _():
        o_ref[...] = (acc_ref[...] + b2_ref[...].astype(jnp.float32)).astype(o_ref.dtype)


def feed_forward(x, gamma, beta, w1, b1, w2, b2, *,
                 tile_n=256, tile_h=512, compute_dtype=jnp.bfloat16):
    """x: (B, S, dim). Weights: w1 (dim, hidden), w2 (hidden, dim). Returns (B, S, dim)."""
    B, S, dim = x.shape
    hidden = w1.shape[1]
    N = B * S

    # --- tile / padding geometry (lane-dense dim, bounded hidden tiles) ---
    dim_p = _round_up(dim, 128)
    tile_h = min(_round_up(tile_h, 128), _round_up(hidden, 128))
    hidden_p = _round_up(hidden, tile_h)
    tile_n = min(_round_up(tile_n, 8), _round_up(N, 8))
    N_p = _round_up(N, tile_n)

    # --- pad operands (zero padding keeps the math exact; see kernel notes) ---
    x2 = jnp.pad(x.reshape(N, dim), ((0, N_p - N), (0, dim_p - dim)))
    gamma_p = jnp.pad(gamma, (0, dim_p - dim)).reshape(1, dim_p)
    beta_p = jnp.pad(beta, (0, dim_p - dim)).reshape(1, dim_p)
    w1_p = jnp.pad(w1, ((0, dim_p - dim), (0, hidden_p - hidden))).astype(compute_dtype)
    b1_p = jnp.pad(b1, (0, hidden_p - hidden)).reshape(1, hidden_p)
    w2_p = jnp.pad(w2, ((0, hidden_p - hidden), (0, dim_p - dim))).astype(compute_dtype)
    b2_p = jnp.pad(b2, (0, dim_p - dim)).reshape(1, dim_p)

    itemsize_c = jnp.dtype(compute_dtype).itemsize
    itemsize_x = jnp.dtype(x.dtype).itemsize

    # VMEM budget estimate (double-buffered tiles + scratch), clamped so a
    # v6e-tuned config still fits v7x's smaller scoped VMEM.
    est = (2 * tile_n * dim_p * itemsize_x            # x tiles (2 buffers)
           + 2 * tile_n * dim_p * itemsize_x          # out tiles (2 buffers)
           + 2 * (dim_p * tile_h + tile_h * dim_p) * itemsize_c   # W1/W2 tiles
           + tile_n * dim_p * 4                       # f32 accumulator
           + tile_n * dim_p * itemsize_c              # cached xn
           + 4 * (2 * dim_p + hidden_p) * 4)          # gamma/beta/biases
    vmem_limit = int(min(48 * 1024 * 1024, max(32 * 1024 * 1024, 2 * est)))

    cost = pl.CostEstimate(
        flops=2 * 2 * N_p * dim_p * hidden_p,
        transcendentals=N_p * hidden_p,
        bytes_accessed=int(x2.size * itemsize_x
                           + w1_p.size * itemsize_c + w2_p.size * itemsize_c
                           + N_p * dim_p * itemsize_x),
    )

    kernel = functools.partial(ffn_kernel, inv_dim=1.0 / float(dim))

    out = pl.pallas_call(
        kernel,
        out_shape=jax.ShapeDtypeStruct((N_p, dim_p), x.dtype),
        grid_spec=pltpu.PrefetchScalarGridSpec(
            num_scalar_prefetch=0,
            grid=(N_p // tile_n, hidden_p // tile_h),
            in_specs=[
                pl.BlockSpec((tile_n, dim_p), lambda i, k: (i, 0)),   # x rows
                pl.BlockSpec((1, dim_p), lambda i, k: (0, 0)),        # LN gamma
                pl.BlockSpec((1, dim_p), lambda i, k: (0, 0)),        # LN beta
                pl.BlockSpec((dim_p, tile_h), lambda i, k: (0, k)),   # W1 tile
                pl.BlockSpec((1, tile_h), lambda i, k: (0, k)),       # b1 tile
                pl.BlockSpec((tile_h, dim_p), lambda i, k: (k, 0)),   # W2 tile
                pl.BlockSpec((1, dim_p), lambda i, k: (0, 0)),        # b2
            ],
            out_specs=pl.BlockSpec((tile_n, dim_p), lambda i, k: (i, 0)),
            scratch_shapes=[
                pltpu.VMEM((tile_n, dim_p), compute_dtype),   # cached LayerNorm output
                pltpu.VMEM((tile_n, dim_p), jnp.float32),     # second-matmul accumulator
            ],
        ),
        compiler_params=pltpu.CompilerParams(
            dimension_semantics=("parallel", "arbitrary"),
            vmem_limit_bytes=vmem_limit),
        cost_estimate=cost,
    )(x2, gamma_p, beta_p, w1_p, b1_p, w2_p, b2_p)

    return out[:N, :dim].reshape(B, S, dim)


def feed_forward_ref(x, gamma, beta, w1, b1, w2, b2):
    # Pure-JAX f32 reference with the PyTorch module's math.
    xf = x.astype(jnp.float32)
    mean = jnp.mean(xf, axis=-1, keepdims=True)
    var = jnp.mean((xf - mean) ** 2, axis=-1, keepdims=True)
    xn = (xf - mean) * jax.lax.rsqrt(var + LN_EPS) * gamma + beta
    h = xn @ w1 + b1
    h = jax.nn.gelu(h, approximate=False)
    return (h @ w2 + b2).astype(x.dtype)


if __name__ == "__main__":
    key = jax.random.PRNGKey(0)
    B, S, DIM, HIDDEN = 2, 8, 128, 256

    kx, kg, kb, kw1, kb1, kw2, kb2 = jax.random.split(key, 7)
    x = jax.random.normal(kx, (B, S, DIM), dtype=jnp.float32)

    # Parameter shapes match nn.LayerNorm(dim), nn.Linear(dim, hidden),
    # nn.Linear(hidden, dim).  Perturb LN affine params to exercise them.
    gamma = 1.0 + 0.1 * jax.random.normal(kg, (DIM,), jnp.float32)
    beta = 0.1 * jax.random.normal(kb, (DIM,), jnp.float32)
    lim1 = 1.0 / (DIM ** 0.5)
    w1 = jax.random.uniform(kw1, (DIM, HIDDEN), jnp.float32, -lim1, lim1)
    b1 = jax.random.uniform(kb1, (HIDDEN,), jnp.float32, -lim1, lim1)
    lim2 = 1.0 / (HIDDEN ** 0.5)
    w2 = jax.random.uniform(kw2, (HIDDEN, DIM), jnp.float32, -lim2, lim2)
    b2 = jax.random.uniform(kb2, (DIM,), jnp.float32, -lim2, lim2)

    y = feed_forward(x, gamma, beta, w1, b1, w2, b2)
    y = jax.block_until_ready(y)

    y_ref = feed_forward_ref(x, gamma, beta, w1, b1, w2, b2)
    assert y.shape == (B, S, DIM)
    # bf16 MXU operands with f32 accumulation -> loosened tolerance vs f32 ref.
    max_err = float(jnp.max(jnp.abs(y.astype(jnp.float32) - y_ref.astype(jnp.float32))))
    assert max_err < 3e-2, f"mismatch vs reference: {max_err}"

    print("KERNEL_OK")
</pallas_src>

<mosaic_0001>
module attributes {stable_mosaic.version = 11 : i64} {
  func.func @ffn_kernel(%arg0: i32, %arg1: i32, %arg2: memref<16x128xf32, #tpu.memory_space<vmem>>, %arg3: memref<1x128xf32, #tpu.memory_space<vmem>>, %arg4: memref<1x128xf32, #tpu.memory_space<vmem>>, %arg5: memref<128x256xbf16, #tpu.memory_space<vmem>>, %arg6: memref<1x256xf32, #tpu.memory_space<vmem>>, %arg7: memref<256x128xbf16, #tpu.memory_space<vmem>>, %arg8: memref<1x128xf32, #tpu.memory_space<vmem>>, %arg9: memref<16x128xf32, #tpu.memory_space<vmem>>, %arg10: memref<16x128xbf16, #tpu.memory_space<vmem>>, %arg11: memref<16x128xf32, #tpu.memory_space<vmem>>) attributes {dimension_semantics = [#tpu.dimension_semantics<parallel>, #tpu.dimension_semantics<arbitrary>], iteration_bounds = array<i64: 1, 1>, scalar_prefetch = 0 : i64, scratch_operands = 2 : i64, tpu.core_type = #tpu.core_type<tc>, window_params = [{transform_indices = @transform_0, window_bounds = array<i64: 16, 128>}, {pipeline_mode = #tpu.pipeline_mode<synchronous>, transform_indices = @transform_1, window_bounds = array<i64: 1, 128>}, {pipeline_mode = #tpu.pipeline_mode<synchronous>, transform_indices = @transform_2, window_bounds = array<i64: 1, 128>}, {transform_indices = @transform_3, window_bounds = array<i64: 128, 256>}, {transform_indices = @transform_4, window_bounds = array<i64: 1, 256>}, {transform_indices = @transform_5, window_bounds = array<i64: 256, 128>}, {pipeline_mode = #tpu.pipeline_mode<synchronous>, transform_indices = @transform_6, window_bounds = array<i64: 1, 128>}, {transform_indices = @transform_7, window_bounds = array<i64: 16, 128>}]} {
    %c0_i32 = arith.constant 0 : i32
    %0 = arith.cmpi eq, %arg1, %c0_i32 : i32
    %1 = arith.extui %0 : i1 to i32
    %c0_i32_0 = arith.constant 0 : i32
    %2 = arith.cmpi ne, %1, %c0_i32_0 : i32
    scf.if %2 {
      %c0_30 = arith.constant 0 : index
      %c0_31 = arith.constant 0 : index
      %58 = vector.load %arg2[%c0_30, %c0_31] : memref<16x128xf32, #tpu.memory_space<vmem>>, vector<16x128xf32>
      %cst_32 = arith.constant dense<0.000000e+00> : vector<16xf32>
      %59 = vector.multi_reduction <add>, %58, %cst_32 [1] : vector<16x128xf32> to vector<16xf32>
      %60 = vector.shape_cast %59 : vector<16xf32> to vector<16x1xf32>
      %cst_33 = arith.constant 7.812500e-03 : f32
      %61 = vector.broadcast %cst_33 : f32 to vector<16x1xf32>
      %62 = arith.mulf %60, %61 : vector<16x1xf32>
      %63 = arith.mulf %58, %58 : vector<16x128xf32>
      %cst_34 = arith.constant dense<0.000000e+00> : vector<16xf32>
      %64 = vector.multi_reduction <add>, %63, %cst_34 [1] : vector<16x128xf32> to vector<16xf32>
      %65 = vector.shape_cast %64 : vector<16xf32> to vector<16x1xf32>
      %cst_35 = arith.constant 7.812500e-03 : f32
      %66 = vector.broadcast %cst_35 : f32 to vector<16x1xf32>
      %67 = arith.mulf %65, %66 : vector<16x1xf32>
      %68 = arith.mulf %62, %62 : vector<16x1xf32>
      %69 = arith.subf %67, %68 : vector<16x1xf32>
      %cst_36 = arith.constant 0.000000e+00 : f32
      %70 = vector.broadcast %cst_36 : f32 to vector<16x1xf32>
      %71 = arith.maximumf %69, %70 : vector<16x1xf32>
      %72 = vector.broadcast %62 : vector<16x1xf32> to vector<16x128xf32>
      %73 = arith.subf %58, %72 : vector<16x128xf32>
      %cst_37 = arith.constant 9.99999974E-6 : f32
      %74 = vector.broadcast %cst_37 : f32 to vector<16x1xf32>
      %75 = arith.addf %71, %74 : vector<16x1xf32>
      %76 = math.rsqrt %75 : vector<16x1xf32>
      %77 = vector.broadcast %76 : vector<16x1xf32> to vector<16x128xf32>
      %78 = arith.mulf %73, %77 : vector<16x128xf32>
      %c0_38 = arith.constant 0 : index
      %c0_39 = arith.constant 0 : index
      %79 = vector.load %arg3[%c0_38, %c0_39] : memref<1x128xf32, #tpu.memory_space<vmem>>, vector<1x128xf32>
      %80 = vector.broadcast %79 : vector<1x128xf32> to vector<16x128xf32>
      %81 = arith.mulf %78, %80 : vector<16x128xf32>
      %c0_40 = arith.constant 0 : index
      %c0_41 = arith.constant 0 : index
      %82 = vector.load %arg4[%c0_40, %c0_41] : memref<1x128xf32, #tpu.memory_space<vmem>>, vector<1x128xf32>
      %83 = vector.broadcast %82 : vector<1x128xf32> to vector<16x128xf32>
      %84 = arith.addf %81, %83 : vector<16x128xf32>
      %85 = arith.truncf %84 : vector<16x128xf32> to vector<16x128xbf16>
      %c0_42 = arith.constant 0 : index
      %c0_43 = arith.constant 0 : index
      %86 = vector.load %arg10[%c0_42, %c0_43] : memref<16x128xbf16, #tpu.memory_space<vmem>>, vector<16x128xbf16>
      tpu.vector_store %arg10[%c0_42, %c0_43], %85 {strides = array<i32>} : memref<16x128xbf16, #tpu.memory_space<vmem>>, vector<16x128xbf16>,
      %cst_44 = arith.constant 0.000000e+00 : f32
      %87 = vector.broadcast %cst_44 : f32 to vector<16x128xf32>
      %c0_45 = arith.constant 0 : index
      %c0_46 = arith.constant 0 : index
      %88 = vector.load %arg11[%c0_45, %c0_46] : memref<16x128xf32, #tpu.memory_space<vmem>>, vector<16x128xf32>
      tpu.vector_store %arg11[%c0_45, %c0_46], %87 {strides = array<i32>} : memref<16x128xf32, #tpu.memory_space<vmem>>, vector<16x128xf32>,
    } else {
    }
    %c0 = arith.constant 0 : index
    %c0_1 = arith.constant 0 : index
    %3 = vector.load %arg10[%c0, %c0_1] : memref<16x128xbf16, #tpu.memory_space<vmem>>, vector<16x128xbf16>
    %c0_2 = arith.constant 0 : index
    %c0_3 = arith.constant 0 : index
    %4 = vector.load %arg5[%c0_2, %c0_3] : memref<128x256xbf16, #tpu.memory_space<vmem>>, vector<128x256xbf16>
    %cst = arith.constant dense<0.000000e+00> : vector<16x256xf32>
    %5 = tpu.matmul %3, %4, %cst {dimension_numbers = #tpu.dot_dimension_numbers<[1], [0], [0], [1], [0, 0, 1, 1], [], []>} : vector<16x128xbf16>, vector<128x256xbf16>, vector<16x256xf32> -> vector<16x256xf32>
    %c0_4 = arith.constant 0 : index
    %c0_5 = arith.constant 0 : index
    %6 = vector.load %arg6[%c0_4, %c0_5] : memref<1x256xf32, #tpu.memory_space<vmem>>, vector<1x256xf32>
    %7 = vector.broadcast %6 : vector<1x256xf32> to vector<16x256xf32>
    %8 = arith.addf %5, %7 : vector<16x256xf32>
    %cst_6 = arith.constant 5.000000e-01 : f32
    %9 = vector.broadcast %cst_6 : f32 to vector<16x256xf32>
    %10 = arith.mulf %9, %8 : vector<16x256xf32>
    %cst_7 = arith.constant 0.707106769 : f32
    %11 = vector.broadcast %cst_7 : f32 to vector<16x256xf32>
    %12 = arith.mulf %8, %11 : vector<16x256xf32>
    %cst_8 = arith.constant 0.000000e+00 : f32
    %13 = vector.broadcast %cst_8 : f32 to vector<16x256xf32>
    %14 = arith.cmpf olt, %12, %13 : vector<16x256xf32>
    %cst_9 = arith.constant -1.000000e+00 : f32
    %cst_10 = arith.constant 1.000000e+00 : f32
    %15 = vector.broadcast %cst_9 : f32 to vector<16x256xf32>
    %16 = vector.broadcast %cst_10 : f32 to vector<16x256xf32>
    %17 = arith.select %14, %15, %16 : vector<16x256xi1>, vector<16x256xf32>
    %18 = math.absf %12 : vector<16x256xf32>
    %cst_11 = arith.constant 0.327591091 : f32
    %19 = vector.broadcast %cst_11 : f32 to vector<16x256xf32>
    %20 = arith.mulf %19, %18 : vector<16x256xf32>
    %cst_12 = arith.constant 1.000000e+00 : f32
    %21 = vector.broadcast %cst_12 : f32 to vector<16x256xf32>
    %22 = arith.addf %21, %20 : vector<16x256xf32>
    %23 = tpu.reciprocal %22 {approx = true} : vector<16x256xf32> -> vector<16x256xf32>
    %cst_13 = arith.constant 1.06140542 : f32
    %24 = vector.broadcast %cst_13 : f32 to vector<16x256xf32>
    %25 = arith.mulf %24, %23 : vector<16x256xf32>
    %cst_14 = arith.constant -1.45315206 : f32
    %26 = vector.broadcast %cst_14 : f32 to vector<16x256xf32>
    %27 = arith.addf %25, %26 : vector<16x256xf32>
    %28 = arith.mulf %27, %23 : vector<16x256xf32>
    %cst_15 = arith.constant 1.42141378 : f32
    %29 = vector.broadcast %cst_15 : f32 to vector<16x256xf32>
    %30 = arith.addf %28, %29 : vector<16x256xf32>
    %31 = arith.mulf %30, %23 : vector<16x256xf32>
    %cst_16 = arith.constant -0.284496725 : f32
    %32 = vector.broadcast %cst_16 : f32 to vector<16x256xf32>
    %33 = arith.addf %31, %32 : vector<16x256xf32>
    %34 = arith.mulf %33, %23 : vector<16x256xf32>
    %cst_17 = arith.constant 0.254829586 : f32
    %35 = vector.broadcast %cst_17 : f32 to vector<16x256xf32>
    %36 = arith.addf %34, %35 : vector<16x256xf32>
    %37 = arith.mulf %36, %23 : vector<16x256xf32>
    %cst_18 = arith.constant 0.000000e+00 : f32
    %38 = vector.broadcast %cst_18 : f32 to vector<16x256xf32>
    %39 = arith.subf %38, %18 : vector<16x256xf32>
    %40 = arith.mulf %39, %18 : vector<16x256xf32>
    %41 = math.exp %40 : vector<16x256xf32>
    %42 = arith.mulf %37, %41 : vector<16x256xf32>
    %cst_19 = arith.constant 1.000000e+00 : f32
    %43 = vector.broadcast %cst_19 : f32 to vector<16x256xf32>
    %44 = arith.subf %43, %42 : vector<16x256xf32>
    %45 = arith.mulf %17, %44 : vector<16x256xf32>
    %cst_20 = arith.constant 1.000000e+00 : f32
    %46 = vector.broadcast %cst_20 : f32 to vector<16x256xf32>
    %47 = arith.addf %46, %45 : vector<16x256xf32>
    %48 = arith.mulf %10, %47 : vector<16x256xf32>
    %c0_21 = arith.constant 0 : index
    %c0_22 = arith.constant 0 : index
    %49 = vector.load %arg11[%c0_21, %c0_22] : memref<16x128xf32, #tpu.memory_space<vmem>>, vector<16x128xf32>
    %50 = arith.truncf %48 : vector<16x256xf32> to vector<16x256xbf16>
    %c0_23 = arith.constant 0 : index
    %c0_24 = arith.constant 0 : index
    %51 = vector.load %arg7[%c0_23, %c0_24] : memref<256x128xbf16, #tpu.memory_space<vmem>>, vector<256x128xbf16>
    %cst_25 = arith.constant dense<0.000000e+00> : vector<16x128xf32>
    %52 = tpu.matmul %50, %51, %cst_25 {dimension_numbers = #tpu.dot_dimension_numbers<[1], [0], [0], [1], [0, 0, 1, 1], [], []>} : vector<16x256xbf16>, vector<256x128xbf16>, vector<16x128xf32> -> vector<16x128xf32>
    %53 = arith.addf %49, %52 : vector<16x128xf32>
    %c0_26 = arith.constant 0 : index
    %c0_27 = arith.constant 0 : index
    %54 = vector.load %arg11[%c0_26, %c0_27] : memref<16x128xf32, #tpu.memory_space<vmem>>, vector<16x128xf32>
    tpu.vector_store %arg11[%c0_26, %c0_27], %53 {strides = array<i32>} : memref<16x128xf32, #tpu.memory_space<vmem>>, vector<16x128xf32>,
    %c0_i32_28 = arith.constant 0 : i32
    %55 = arith.cmpi eq, %arg1, %c0_i32_28 : i32
    %56 = arith.extui %55 : i1 to i32
    %c0_i32_29 = arith.constant 0 : i32
    %57 = arith.cmpi ne, %56, %c0_i32_29 : i32
    scf.if %57 {
      %c0_30 = arith.constant 0 : index
      %c0_31 = arith.constant 0 : index
      %58 = vector.load %arg11[%c0_30, %c0_31] : memref<16x128xf32, #tpu.memory_space<vmem>>, vector<16x128xf32>
      %c0_32 = arith.constant 0 : index
      %c0_33 = arith.constant 0 : index
      %59 = vector.load %arg8[%c0_32, %c0_33] : memref<1x128xf32, #tpu.memory_space<vmem>>, vector<1x128xf32>
      %60 = vector.broadcast %59 : vector<1x128xf32> to vector<16x128xf32>
      %61 = arith.addf %58, %60 : vector<16x128xf32>
      %c0_34 = arith.constant 0 : index
      %c0_35 = arith.constant 0 : index
      %62 = vector.load %arg9[%c0_34, %c0_35] : memref<16x128xf32, #tpu.memory_space<vmem>>, vector<16x128xf32>
      tpu.vector_store %arg9[%c0_34, %c0_35], %61 {strides = array<i32>} : memref<16x128xf32, #tpu.memory_space<vmem>>, vector<16x128xf32>,
    } else {
    }
    return
  }
  func.func @transform_0(%arg0: i32, %arg1: i32) -> (i32, i32) {
    %c0_i32 = arith.constant 0 : i32
    %c0_i32_0 = arith.constant 0 : i32
    return %arg0, %c0_i32 : i32, i32
  }
  func.func @transform_1(%arg0: i32, %arg1: i32) -> (i32, i32) {
    %c0_i32 = arith.constant 0 : i32
    %c0_i32_0 = arith.constant 0 : i32
    %c0_i32_1 = arith.constant 0 : i32
    return %c0_i32, %c0_i32_0 : i32, i32
  }
  func.func @transform_2(%arg0: i32, %arg1: i32) -> (i32, i32) {
    %c0_i32 = arith.constant 0 : i32
    %c0_i32_0 = arith.constant 0 : i32
    %c0_i32_1 = arith.constant 0 : i32
    return %c0_i32, %c0_i32_0 : i32, i32
  }
  func.func @transform_3(%arg0: i32, %arg1: i32) -> (i32, i32) {
    %c0_i32 = arith.constant 0 : i32
    %c0_i32_0 = arith.constant 0 : i32
    return %c0_i32, %arg1 : i32, i32
  }
  func.func @transform_4(%arg0: i32, %arg1: i32) -> (i32, i32) {
    %c0_i32 = arith.constant 0 : i32
    %c0_i32_0 = arith.constant 0 : i32
    return %c0_i32, %arg1 : i32, i32
  }
  func.func @transform_5(%arg0: i32, %arg1: i32) -> (i32, i32) {
    %c0_i32 = arith.constant 0 : i32
    %c0_i32_0 = arith.constant 0 : i32
    return %arg1, %c0_i32 : i32, i32
  }
  func.func @transform_6(%arg0: i32, %arg1: i32) -> (i32, i32) {
    %c0_i32 = arith.constant 0 : i32
    %c0_i32_0 = arith.constant 0 : i32
    %c0_i32_1 = arith.constant 0 : i32
    return %c0_i32, %c0_i32_0 : i32, i32
  }
  func.func @transform_7(%arg0: i32, %arg1: i32) -> (i32, i32) {
    %c0_i32 = arith.constant 0 : i32
    %c0_i32_0 = arith.constant 0 : i32
    return %arg0, %c0_i32 : i32, i32
  }
}

</mosaic_0001>

<llo_original>
// kernel: tpu_custom_call.1
$region0: #{tpu_custom_call.1}
  #allocation0 [shape = 'u32[]', space=smem, size = 0x4, offset = 0x4, fixed_abs, tag = 'smem constant byte address 0x4 - core index']
  #allocation1 [shape = 'u32[144,128]{1,0:T(1,128)}', space=vmem, size = 0x12000, scoped, tag = 'internal scratch']
  #allocation2 [shape = 'bf16[16,128]{1,0:T(8,128)(2,1)}', space=vmem, size = 0x1000, scoped, tag = 'scratch operand']
  #allocation3 [shape = 'f32[16,128]{1,0:T(8,128)}', space=vmem, size = 0x2000, scoped, tag = 'scratch operand']
  %s0 = inlined_call_operand.hbm [shape: f32[16,128], index: 0, kind: input, shape index: {}]
  %s1 = inlined_call_operand.vmem [shape: f32[1,128], index: 1, kind: input, shape index: {}]
  %s2 = inlined_call_operand.hbm [shape: f32[1,128], index: 2, kind: input, shape index: {}]
  %s3 = inlined_call_operand.hbm [shape: bf16[128,256], index: 3, kind: input, shape index: {}]
  %s4 = inlined_call_operand.vmem [shape: f32[1,256], index: 4, kind: input, shape index: {}]
  %s5 = inlined_call_operand.hbm [shape: bf16[256,128], index: 5, kind: input, shape index: {}]
  %s6 = inlined_call_operand.vmem [shape: f32[1,128], index: 6, kind: input, shape index: {}]
  %s7 = inlined_call_operand.hbm [shape: f32[16,128], index: 7, kind: output, shape index: {}]
  %s8 = sld [smem:[#allocation0]]
  $region62: #{tpu_custom_call.1} parent=0
    _
  %s10 = ssub.s32 1, %s8
  %s11 = scalar_select 0, %s10, %s8
  $region1: #{tpu_custom_call.1} parent=0
    #allocation4 [shape = 'u8[8192]{0}', space=vmem, size = 0x2000, scoped, tag = 'input window, operand 0, single buffered']
    #allocation5 [shape = 's32[1]{0}', space=sflag, size = 0x4, scoped, tag = 'scoped memory for tpu_custom_call.1']
    #allocation6 [shape = 's32[1]{0}', space=sflag, size = 0x4, scoped, tag = 'scoped memory for tpu_custom_call.1']
    #allocation7 [shape = 'u8[512]{0}', space=vmem, size = 0x400, scoped, tag = 'input window, operand 2, single buffered']
    #allocation8 [shape = 's32[1]{0}', space=sflag, size = 0x4, scoped, tag = 'scoped memory for tpu_custom_call.1']
    #allocation9 [shape = 'u8[65536]{0}', space=vmem, size = 0x10000, scoped, tag = 'input window, operand 3, single buffered']
    #allocation10 [shape = 'u8[65536]{0}', space=vmem, size = 0x10000, scoped, tag = 'input window, operand 5, single buffered']
    #allocation11 [shape = 's32[1]{0}', space=sflag, size = 0x4, scoped, tag = 'scoped memory for tpu_custom_call.1']
    #allocation12 [shape = 'u8[8192]{0}', space=vmem, size = 0x2000, scoped, tag = 'output window, operand 0, single buffered']
    %12 = vsyncpa [#allocation5], 0
    %13 = vsyncpa [#allocation8], 0
    %14 = vsyncpa [#allocation11], 0
    %15 = vsyncpa [#allocation6], 0
    // Predicated region
    $region2: #{tpu_custom_call.1} parent=1 // pred_check
      _
    $region3: #{tpu_custom_call.1} parent=1 // pred_check_branch
      %17 = sbr.rel (0) target = $region5
    $region4: #{tpu_custom_call.1} parent=1 // pred_region
      %s19 = ssub.s32 256, 256
      %20 = vsyncadd [#allocation5], %s19
      %s21 = sshll.u32 [#allocation4], 4
      %s22 = int_to_ptr.vmem [resolvable:$true] %s21
      %27 = dma.hbm_to_vmem [thread:$0]  %s0, 256, %s22, [#allocation5], 128, 128, 8
    $region5: #{tpu_custom_call.1} parent=1 // pred_fallthru
      _
    // Predicated region
    $region6: #{tpu_custom_call.1} parent=1 // pred_check
      _
    $region7: #{tpu_custom_call.1} parent=1 // pred_check_branch
      %29 = sbr.rel (0) target = $region9
    $region8: #{tpu_custom_call.1} parent=1 // pred_region
      _
    $region9: #{tpu_custom_call.1} parent=1 // pred_fallthru
      _
    // Predicated region
    $region10: #{tpu_custom_call.1} parent=1 // pred_check
      _
    $region11: #{tpu_custom_call.1} parent=1 // pred_check_branch
      %31 = sbr.rel (0) target = $region13
    $region12: #{tpu_custom_call.1} parent=1 // pred_region
      %s33 = ssub.s32 16, 16
      %34 = vsyncadd [#allocation8], %s33
      %s36 = sshll.u32 [#allocation7], 4
      %s37 = int_to_ptr.vmem [resolvable:$true] %s36
      %39 = dma.hbm_to_vmem [thread:$0]  %s2, 16, %s37, [#allocation8]
    $region13: #{tpu_custom_call.1} parent=1 // pred_fallthru
      _
    // Predicated region
    $region14: #{tpu_custom_call.1} parent=1 // pred_check
      _
    $region15: #{tpu_custom_call.1} parent=1 // pred_check_branch
      %41 = sbr.rel (0) target = $region17
    $region16: #{tpu_custom_call.1} parent=1 // pred_region
      %s43 = ssub.s32 2048, 2048
      %44 = vsyncadd [#allocation8], %s43
      %s45 = sshll.u32 [#allocation9], 4
      %s46 = int_to_ptr.vmem [resolvable:$true] %s45
      %51 = dma.hbm_to_vmem [thread:$0]  %s3, 2048, %s46, [#allocation8], 128, 128, 8
    $region17: #{tpu_custom_call.1} parent=1 // pred_fallthru
      _
    // Predicated region
    $region18: #{tpu_custom_call.1} parent=1 // pred_check
      _
    $region19: #{tpu_custom_call.1} parent=1 // pred_check_branch
      %53 = sbr.rel (0) target = $region21
    $region20: #{tpu_custom_call.1} parent=1 // pred_region
      _
    $region21: #{tpu_custom_call.1} parent=1 // pred_fallthru
      _
    // Predicated region
    $region22: #{tpu_custom_call.1} parent=1 // pred_check
      _
    $region23: #{tpu_custom_call.1} parent=1 // pred_check_branch
      %55 = sbr.rel (0) target = $region25
    $region24: #{tpu_custom_call.1} parent=1 // pred_region
      %s57 = ssub.s32 2048, 2048
      %58 = vsyncadd [#allocation11], %s57
      %s59 = sshll.u32 [#allocation10], 4
      %s60 = int_to_ptr.vmem [resolvable:$true] %s59
      %65 = dma.hbm_to_vmem [thread:$0]  %s5, 2048, %s60, [#allocation11], 64, 64, 4
    $region25: #{tpu_custom_call.1} parent=1 // pred_fallthru
      _
    // Predicated region
    $region26: #{tpu_custom_call.1} parent=1 // pred_check
      _
    $region27: #{tpu_custom_call.1} parent=1 // pred_check_branch
      %67 = sbr.rel (0) target = $region29
    $region28: #{tpu_custom_call.1} parent=1 // pred_region
      _
    $region29: #{tpu_custom_call.1} parent=1 // pred_fallthru
      _
    // Predicated region
    $region30: #{tpu_custom_call.1} parent=1 // pred_check
      _
    $region31: #{tpu_custom_call.1} parent=1 // pred_check_branch
      %69 = sbr.rel (0) target = $region33
    $region32: #{tpu_custom_call.1} parent=1 // pred_region
      %70 = dma.done [#allocation5], 256
    $region33: #{tpu_custom_call.1} parent=1 // pred_fallthru
      _
    // Predicated region
    $region34: #{tpu_custom_call.1} parent=1 // pred_check
      _
    $region35: #{tpu_custom_call.1} parent=1 // pred_check_branch
      %72 = sbr.rel (0) target = $region37
    $region36: #{tpu_custom_call.1} parent=1 // pred_region
      %73 = dma.done [#allocation8], 16
    $region37: #{tpu_custom_call.1} parent=1 // pred_fallthru
      _
    // Predicated region
    $region38: #{tpu_custom_call.1} parent=1 // pred_check
      _
    $region39: #{tpu_custom_call.1} parent=1 // pred_check_branch
      %75 = sbr.rel (0) target = $region41
    $region40: #{tpu_custom_call.1} parent=1 // pred_region
      %76 = dma.done [#allocation8], 2048
    $region41: #{tpu_custom_call.1} parent=1 // pred_fallthru
      _
    // Predicated region
    $region42: #{tpu_custom_call.1} parent=1 // pred_check
      _
    $region43: #{tpu_custom_call.1} parent=1 // pred_check_branch
      %78 = sbr.rel (0) target = $region45
    $region44: #{tpu_custom_call.1} parent=1 // pred_region
      %79 = dma.done [#allocation11], 2048
    $region45: #{tpu_custom_call.1} parent=1 // pred_fallthru
      _
    %p81 = scmp.eq.s32.totalorder 0, 0
    // Predicated region
    $region46: #{tpu_custom_call.1} parent=1 // pred_check
      %p82 = pneg %p81
    $region47: #{tpu_custom_call.1} parent=1 // pred_check_branch
      %84 = sbr.rel (%p82) target = $region49
    $region48: #{tpu_custom_call.1} parent=1 // pred_region
      %v85 = vld [vmem:[#allocation4] sm:$0xff]
      %v86 = vld [vmem:[#allocation4 + $0x8] sm:$0xff]
      %87 = vadd.xlane.f32.xlu0 %v85
      %v88 = vpop.xlane.xlu0 %87
      %89 = vadd.xlane.f32.xlu0 %v86
      %v90 = vpop.xlane.xlu0 %89
      %v91 = vmul.f32 %v88, 0.0078125
      %v92 = vmul.f32 %v90, 0.0078125
      %v93 = vmul.f32 %v85, %v85
      %v94 = vmul.f32 %v86, %v86
      %95 = vadd.xlane.f32.xlu0 %v93
      %v96 = vpop.xlane.xlu0 %95
      %97 = vadd.xlane.f32.xlu0 %v94
      %v98 = vpop.xlane.xlu0 %97
      %v99 = vmul.f32 %v96, 0.0078125
      %v100 = vmul.f32 %v98, 0.0078125
      %v101 = vmul.f32 %v91, %v91
      %v102 = vmul.f32 %v92, %v92
      %v103 = vsub.f32 %v99, %v101
      %v104 = vsub.f32 %v100, %v102
      %v105 = vmax.f32 %v103, 0.0
      %v106 = vmax.f32 %v104, 0.0
      %v107 = vsub.f32 %v85, %v91
      %v108 = vsub.f32 %v86, %v92
      %v109 = vadd.f32 %v105, 1e-05
      %v110 = vadd.f32 %v106, 1e-05
      %v111 = vrsqrt.pop %v109
      %v112 = vrsqrt.pop %v110
      %v113 = vmul.f32 %v107, %v111
      %v114 = vmul.f32 %v108, %v112
      %v115 = vld [vmem:[%s1] sm:$0x1]
      %v117 = vlaneseq
      %v118 = vshrl.u32 %v117, 7
      %v119 = vsub.s32 0, %v118
      %v120 = vrot.slane %v115, %v119
      %v122 = vmul.f32 %v113, %v120
      %v123 = vmul.f32 %v114, %v120
      %v124 = vld [vmem:[#allocation7] sm:$0x1]
      %v126 = vlaneseq
      %v127 = vshrl.u32 %v126, 7
      %v128 = vsub.s32 0, %v127
      %v129 = vrot.slane %v124, %v128
      %v131 = vadd.f32 %v122, %v129
      %v132 = vadd.f32 %v123, %v129
      %v133 = vpack.c.bf16 %v132, %v131
      %v135 = vunpack.c.l.b16 %v133
      %v136 = vunpack.c.h.b16 %v133
      %v137 = vpack.c.b16 %v135, %v135
      %v138 = vpack.c.b16 %v136, %v136
      %141 = vst [vmem:[#allocation2] sm:$0xf] %v137
      %142 = vst [vmem:[#allocation2 + $0x4] sm:$0xf] %v138
      %143 = vst [vmem:[#allocation3] sm:$0xff] 0.0
      %144 = vst [vmem:[#allocation3 + $0x8] sm:$0xff] 0.0
    $region49: #{tpu_custom_call.1} parent=1 // pred_fallthru
      _
    %v145 = vld [vmem:[#allocation2] sm:$0xf]
    %v146 = vld [vmem:[#allocation2 + $0x4] sm:$0xf]
    %v147 = vld [vmem:[#allocation9] sm:$0xff]
    %v148 = vld [vmem:[#allocation9 + $0x8] sm:$0xff]
    %v149 = vld [vmem:[#allocation9 + $0x10] sm:$0xff]
    %v150 = vld [vmem:[#allocation9 + $0x18] sm:$0xff]
    %v151 = vld [vmem:[#allocation9 + $0x20] sm:$0xff]
    %v152 = vld [vmem:[#allocation9 + $0x28] sm:$0xff]
    %v153 = vld [vmem:[#allocation9 + $0x30] sm:$0xff]
    %v154 = vld [vmem:[#allocation9 + $0x38] sm:$0xff]
    %v155 = vld [vmem:[#allocation9 + $0x40] sm:$0xff]
    %v156 = vld [vmem:[#allocation9 + $0x48] sm:$0xff]
    %v157 = vld [vmem:[#allocation9 + $0x50] sm:$0xff]
    %v158 = vld [vmem:[#allocation9 + $0x58] sm:$0xff]
    %v159 = vld [vmem:[#allocation9 + $0x60] sm:$0xff]
    %v160 = vld [vmem:[#allocation9 + $0x68] sm:$0xff]
    %v161 = vld [vmem:[#allocation9 + $0x70] sm:$0xff]
    %v162 = vld [vmem:[#allocation9 + $0x78] sm:$0xff]
    %v163 = vld [vmem:[%s4] sm:$0x3]
    %v165 = vlaneseq
    %v166 = vshrl.u32 %v165, 7
    %v167 = vsub.s32 0, %v166
    %v168 = vrot.slane %v163, %v167
    %v169 = vlaneseq
    %v170 = vshrl.u32 %v169, 7
    %v171 = vsub.s32 1, %v170
    %v172 = vrot.slane %v163, %v171
    %v177 = vunpack.c.l.b16 %v145
    %v178 = vunpack.c.l.b16 %v146
    %v179 = vpack.c.b16 %v178, %v177
    %v197 = vunpack.c.l.b16 %v147
    %v198 = vunpack.c.h.b16 %v147
    %v199 = vunpack.c.l.b16 %v148
    %v200 = vunpack.c.h.b16 %v148
    %v201 = vunpack.c.l.b16 %v149
    %v202 = vunpack.c.h.b16 %v149
    %v203 = vunpack.c.l.b16 %v150
    %v204 = vunpack.c.h.b16 %v150
    %v205 = vunpack.c.l.b16 %v151
    %v206 = vunpack.c.h.b16 %v151
    %v207 = vunpack.c.l.b16 %v152
    %v208 = vunpack.c.h.b16 %v152
    %v209 = vunpack.c.l.b16 %v153
    %v210 = vunpack.c.h.b16 %v153
    %v211 = vunpack.c.l.b16 %v154
    %v212 = vunpack.c.h.b16 %v154
    %v213 = vunpack.c.l.b16 %v155
    %v214 = vunpack.c.h.b16 %v155
    %v215 = vunpack.c.l.b16 %v156
    %v216 = vunpack.c.h.b16 %v156
    %v217 = vunpack.c.l.b16 %v157
    %v218 = vunpack.c.h.b16 %v157
    %v219 = vunpack.c.l.b16 %v158
    %v220 = vunpack.c.h.b16 %v158
    %v221 = vunpack.c.l.b16 %v159
    %v222 = vunpack.c.h.b16 %v159
    %v223 = vunpack.c.l.b16 %v160
    %v224 = vunpack.c.h.b16 %v160
    %v225 = vunpack.c.l.b16 %v161
    %v226 = vunpack.c.h.b16 %v161
    %v227 = vunpack.c.l.b16 %v162
    %v228 = vunpack.c.h.b16 %v162
    %v229 = vpack.c.b16 %v199, %v197
    %v230 = vpack.c.b16 %v200, %v198
    %v231 = vpack.c.b16 %v203, %v201
    %v232 = vpack.c.b16 %v204, %v202
    %v233 = vpack.c.b16 %v207, %v205
    %v234 = vpack.c.b16 %v208, %v206
    %v235 = vpack.c.b16 %v211, %v209
    %v236 = vpack.c.b16 %v212, %v210
    %v237 = vpack.c.b16 %v215, %v213
    %v238 = vpack.c.b16 %v216, %v214
    %v239 = vpack.c.b16 %v219, %v217
    %v240 = vpack.c.b16 %v220, %v218
    %v241 = vpack.c.b16 %v223, %v221
    %v242 = vpack.c.b16 %v224, %v222
    %v243 = vpack.c.b16 %v227, %v225
    %v244 = vpack.c.b16 %v228, %v226
    %261 = vmatprep.subr.bf16.mxu0 %v244
    %262 = vmatpush1.bf16.msra.mxu0 %v243
    %263 = vmatprep.subr.bf16.mxu0 %v242
    %264 = vmatpush1.bf16.msra.mxu0 %v241
    %265 = vmatprep.subr.bf16.mxu0 %v240
    %266 = vmatpush1.bf16.msra.mxu0 %v239
    %267 = vmatprep.subr.bf16.mxu0 %v238
    %268 = vmatpush1.bf16.msra.mxu0 %v237
    %269 = vmatprep.subr.bf16.mxu0 %v236
    %270 = vmatpush1.bf16.msra.mxu0 %v235
    %271 = vmatprep.subr.bf16.mxu0 %v234
    %272 = vmatpush1.bf16.msra.mxu0 %v233
    %273 = vmatprep.subr.bf16.mxu0 %v232
    %274 = vmatpush1.bf16.msra.mxu0 %v231
    %275 = vmatprep.subr.bf16.mxu0 %v230
    %276 = vmatpush1.bf16.msra.mxu0 %v229
    %277 = vmatprep.subr.bf16.mxu0 0
    %278 = vmatpush2.bf16.msra.mxu0 0
    %279 = vmatprep.subr.bf16.mxu0 0
    %280 = vmatpush2.bf16.msra.mxu0 0
    %281 = vmatprep.subr.bf16.mxu0 0
    %282 = vmatpush2.bf16.msra.mxu0 0
    %283 = vmatprep.subr.bf16.mxu0 0
    %284 = vmatpush2.bf16.msra.mxu0 0
    %285 = vmatprep.subr.bf16.mxu0 0
    %286 = vmatpush2.bf16.msra.mxu0 0
    %287 = vmatprep.subr.bf16.mxu0 0
    %288 = vmatpush2.bf16.msra.mxu0 0
    %289 = vmatprep.subr.bf16.mxu0 0
    %290 = vmatpush2.bf16.msra.mxu0 0
    %291 = vmatprep.subr.bf16.mxu0 0
    %292 = vmatpush2.bf16.msra.mxu0 0
    %293 = vmatprep.mubr.bf16.mxu0 0
    %294 = vmatmul.mubr.bf16.gmra.mxu0 %v179
    %v295 = vpop.f32.mrf.mxu0
    %v296 = vadd.f32 %v168, %v295
    %v297 = vpop.f32.mrf.mxu0
    %v298 = vadd.f32 %v172, %v297
    %v299 = vpop.f32.mrf.mxu0
    %v300 = vadd.f32 %v168, %v299
    %v301 = vpop.f32.mrf.mxu0
    %v302 = vadd.f32 %v172, %v301
    %303 = vdwg.mxu0
    %v304 = vmul.f32 %v296, 0.5
    %v305 = vmul.f32 %v298, 0.5
    %v306 = vmul.f32 %v300, 0.5
    %v307 = vmul.f32 %v302, 0.5
    %v308 = vmul.f32 %v296, 0.70710677
    %v309 = vmul.f32 %v298, 0.70710677
    %v310 = vmul.f32 %v300, 0.70710677
    %v311 = vmul.f32 %v302, 0.70710677
    %vm312 = vcmp.lt.f32.partialorder %v308, 0.0
    %vm313 = vcmp.lt.f32.partialorder %v309, 0.0
    %vm314 = vcmp.lt.f32.partialorder %v310, 0.0
    %vm315 = vcmp.lt.f32.partialorder %v311, 0.0
    %v316 = vsel %vm312, -1.0, 1.0
    %v317 = vsel %vm313, -1.0, 1.0
    %v318 = vsel %vm314, -1.0, 1.0
    %v319 = vsel %vm315, -1.0, 1.0
    %v320 = vand.u32 2147483647, %v308
    %v321 = vand.u32 2147483647, %v309
    %v322 = vand.u32 2147483647, %v310
    %v323 = vand.u32 2147483647, %v311
    %v324 = vmul.f32 %v320, 0.3275911
    %v325 = vmul.f32 %v321, 0.3275911
    %v326 = vmul.f32 %v322, 0.3275911
    %v327 = vmul.f32 %v323, 0.3275911
    %v328 = vadd.f32 %v324, 1.0
    %v329 = vadd.f32 %v325, 1.0
    %v330 = vadd.f32 %v326, 1.0
    %v331 = vadd.f32 %v327, 1.0
    %v332 = vrcp.pop %v328
    %v333 = vrcp.pop %v329
    %v334 = vrcp.pop %v330
    %v335 = vrcp.pop %v331
    %v336 = vmul.f32 %v332, 1.0614054
    %v337 = vmul.f32 %v333, 1.0614054
    %v338 = vmul.f32 %v334, 1.0614054
    %v339 = vmul.f32 %v335, 1.0614054
    %v340 = vadd.f32 %v336, -1.4531521
    %v341 = vadd.f32 %v337, -1.4531521
    %v342 = vadd.f32 %v338, -1.4531521
    %v343 = vadd.f32 %v339, -1.4531521
    %v344 = vmul.f32 %v340, %v332
    %v345 = vmul.f32 %v341, %v333
    %v346 = vmul.f32 %v342, %v334
    %v347 = vmul.f32 %v343, %v335
    %v348 = vadd.f32 %v344, 1.4214138
    %v349 = vadd.f32 %v345, 1.4214138
    %v350 = vadd.f32 %v346, 1.4214138
    %v351 = vadd.f32 %v347, 1.4214138
    %v352 = vmul.f32 %v348, %v332
    %v353 = vmul.f32 %v349, %v333
    %v354 = vmul.f32 %v350, %v334
    %v355 = vmul.f32 %v351, %v335
    %v356 = vadd.f32 %v352, -0.28449672
    %v357 = vadd.f32 %v353, -0.28449672
    %v358 = vadd.f32 %v354, -0.28449672
    %v359 = vadd.f32 %v355, -0.28449672
    %v360 = vmul.f32 %v356, %v332
    %v361 = vmul.f32 %v357, %v333
    %v362 = vmul.f32 %v358, %v334
    %v363 = vmul.f32 %v359, %v335
    %v364 = vadd.f32 %v360, 0.2548296
    %v365 = vadd.f32 %v361, 0.2548296
    %v366 = vadd.f32 %v362, 0.2548296
    %v367 = vadd.f32 %v363, 0.2548296
    %v368 = vmul.f32 %v364, %v332
    %v369 = vmul.f32 %v365, %v333
    %v370 = vmul.f32 %v366, %v334
    %v371 = vmul.f32 %v367, %v335
    %v372 = vsub.f32 0.0, %v320
    %v373 = vsub.f32 0.0, %v321
    %v374 = vsub.f32 0.0, %v322
    %v375 = vsub.f32 0.0, %v323
    %v376 = vmul.f32 %v372, %v320
    %v377 = vmul.f32 %v373, %v321
    %v378 = vmul.f32 %v374, %v322
    %v379 = vmul.f32 %v375, %v323
    %v380 = vmul.f32 %v376, 1.442695
    %v381 = vpow.pop %v380
    %v382 = vmul.f32 %v377, 1.442695
    %v383 = vpow.pop %v382
    %v384 = vmul.f32 %v378, 1.442695
    %v385 = vpow.pop %v384
    %v386 = vmul.f32 %v379, 1.442695
    %v387 = vpow.pop %v386
    %v388 = vmul.f32 %v368, %v381
    %v389 = vmul.f32 %v369, %v383
    %v390 = vmul.f32 %v370, %v385
    %v391 = vmul.f32 %v371, %v387
    %v392 = vsub.f32 1.0, %v388
    %v393 = vsub.f32 1.0, %v389
    %v394 = vsub.f32 1.0, %v390
    %v395 = vsub.f32 1.0, %v391
    %v396 = vmul.f32 %v316, %v392
    %v397 = vmul.f32 %v317, %v393
    %v398 = vmul.f32 %v318, %v394
    %v399 = vmul.f32 %v319, %v395
    %v400 = vadd.f32 %v396, 1.0
    %v401 = vadd.f32 %v397, 1.0
    %v402 = vadd.f32 %v398, 1.0
    %v403 = vadd.f32 %v399, 1.0
    %v404 = vmul.f32 %v304, %v400
    %v405 = vmul.f32 %v305, %v401
    %v406 = vmul.f32 %v306, %v402
    %v407 = vmul.f32 %v307, %v403
    %v408 = vld [vmem:[#allocation3] sm:$0xff]
    %v409 = vld [vmem:[#allocation3 + $0x8] sm:$0xff]
    %v410 = vpack.c.bf16 %v406, %v404
    %v411 = vpack.c.bf16 %v407, %v405
    %v412 = vld [vmem:[#allocation10] sm:$0xf]
    %v413 = vld [vmem:[#allocation10 + $0x4] sm:$0xf]
    %v414 = vld [vmem:[#allocation10 + $0x8] sm:$0xf]
    %v415 = vld [vmem:[#allocation10 + $0xc] sm:$0xf]
    %v416 = vld [vmem:[#allocation10 + $0x10] sm:$0xf]
    %v417 = vld [vmem:[#allocation10 + $0x14] sm:$0xf]
    %v418 = vld [vmem:[#allocation10 + $0x18] sm:$0xf]
    %v419 = vld [vmem:[#allocation10 + $0x1c] sm:$0xf]
    %v420 = vld [vmem:[#allocation10 + $0x20] sm:$0xf]
    %v421 = vld [vmem:[#allocation10 + $0x24] sm:$0xf]
    %v422 = vld [vmem:[#allocation10 + $0x28] sm:$0xf]
    %v423 = vld [vmem:[#allocation10 + $0x2c] sm:$0xf]
    %v424 = vld [vmem:[#allocation10 + $0x30] sm:$0xf]
    %v425 = vld [vmem:[#allocation10 + $0x34] sm:$0xf]
    %v426 = vld [vmem:[#allocation10 + $0x38] sm:$0xf]
    %v427 = vld [vmem:[#allocation10 + $0x3c] sm:$0xf]
    %v428 = vld [vmem:[#allocation10 + $0x40] sm:$0xf]
    %v429 = vld [vmem:[#allocation10 + $0x44] sm:$0xf]
    %v430 = vld [vmem:[#allocation10 + $0x48] sm:$0xf]
    %v431 = vld [vmem:[#allocation10 + $0x4c] sm:$0xf]
    %v432 = vld [vmem:[#allocation10 + $0x50] sm:$0xf]
    %v433 = vld [vmem:[#allocation10 + $0x54] sm:$0xf]
    %v434 = vld [vmem:[#allocation10 + $0x58] sm:$0xf]
    %v435 = vld [vmem:[#allocation10 + $0x5c] sm:$0xf]
    %v436 = vld [vmem:[#allocation10 + $0x60] sm:$0xf]
    %v437 = vld [vmem:[#allocation10 + $0x64] sm:$0xf]
    %v438 = vld [vmem:[#allocation10 + $0x68] sm:$0xf]
    %v439 = vld [vmem:[#allocation10 + $0x6c] sm:$0xf]
    %v440 = vld [vmem:[#allocation10 + $0x70] sm:$0xf]
    %v441 = vld [vmem:[#allocation10 + $0x74] sm:$0xf]
    %v442 = vld [vmem:[#allocation10 + $0x78] sm:$0xf]
    %v443 = vld [vmem:[#allocation10 + $0x7c] sm:$0xf]
    %v476 = vunpack.c.l.b16 %v412
    %v477 = vunpack.c.l.b16 %v413
    %v478 = vunpack.c.l.b16 %v414
    %v479 = vunpack.c.l.b16 %v415
    %v480 = vunpack.c.l.b16 %v416
    %v481 = vunpack.c.l.b16 %v417
    %v482 = vunpack.c.l.b16 %v418
    %v483 = vunpack.c.l.b16 %v419
    %v484 = vunpack.c.l.b16 %v420
    %v485 = vunpack.c.l.b16 %v421
    %v486 = vunpack.c.l.b16 %v422
    %v487 = vunpack.c.l.b16 %v423
    %v488 = vunpack.c.l.b16 %v424
    %v489 = vunpack.c.l.b16 %v425
    %v490 = vunpack.c.l.b16 %v426
    %v491 = vunpack.c.l.b16 %v427
    %v492 = vunpack.c.l.b16 %v428
    %v493 = vunpack.c.l.b16 %v429
    %v494 = vunpack.c.l.b16 %v430
    %v495 = vunpack.c.l.b16 %v431
    %v496 = vunpack.c.l.b16 %v432
    %v497 = vunpack.c.l.b16 %v433
    %v498 = vunpack.c.l.b16 %v434
    %v499 = vunpack.c.l.b16 %v435
    %v500 = vunpack.c.l.b16 %v436
    %v501 = vunpack.c.l.b16 %v437
    %v502 = vunpack.c.l.b16 %v438
    %v503 = vunpack.c.l.b16 %v439
    %v504 = vunpack.c.l.b16 %v440
    %v505 = vunpack.c.l.b16 %v441
    %v506 = vunpack.c.l.b16 %v442
    %v507 = vunpack.c.l.b16 %v443
    %v508 = vpack.c.b16 %v477, %v476
    %v509 = vpack.c.b16 %v479, %v478
    %v510 = vpack.c.b16 %v481, %v480
    %v511 = vpack.c.b16 %v483, %v482
    %v512 = vpack.c.b16 %v485, %v484
    %v513 = vpack.c.b16 %v487, %v486
    %v514 = vpack.c.b16 %v489, %v488
    %v515 = vpack.c.b16 %v491, %v490
    %v516 = vpack.c.b16 %v493, %v492
    %v517 = vpack.c.b16 %v495, %v494
    %v518 = vpack.c.b16 %v497, %v496
    %v519 = vpack.c.b16 %v499, %v498
    %v520 = vpack.c.b16 %v501, %v500
    %v521 = vpack.c.b16 %v503, %v502
    %v522 = vpack.c.b16 %v505, %v504
    %v523 = vpack.c.b16 %v507, %v506
    %540 = vmatprep.subr.bf16.mxu0 0
    %541 = vmatpush1.bf16.msra.mxu0 %v515
    %542 = vmatprep.subr.bf16.mxu0 0
    %543 = vmatpush1.bf16.msra.mxu0 %v514
    %544 = vmatprep.subr.bf16.mxu0 0
    %545 = vmatpush1.bf16.msra.mxu0 %v513
    %546 = vmatprep.subr.bf16.mxu0 0
    %547 = vmatpush1.bf16.msra.mxu0 %v512
    %548 = vmatprep.subr.bf16.mxu0 0
    %549 = vmatpush1.bf16.msra.mxu0 %v511
    %550 = vmatprep.subr.bf16.mxu0 0
    %551 = vmatpush1.bf16.msra.mxu0 %v510
    %552 = vmatprep.subr.bf16.mxu0 0
    %553 = vmatpush1.bf16.msra.mxu0 %v509
    %554 = vmatprep.subr.bf16.mxu0 0
    %555 = vmatpush1.bf16.msra.mxu0 %v508
    %556 = vmatprep.subr.bf16.mxu0 0
    %557 = vmatpush2.bf16.msra.mxu0 %v523
    %558 = vmatprep.subr.bf16.mxu0 0
    %559 = vmatpush2.bf16.msra.mxu0 %v522
    %560 = vmatprep.subr.bf16.mxu0 0
    %561 = vmatpush2.bf16.msra.mxu0 %v521
    %562 = vmatprep.subr.bf16.mxu0 0
    %563 = vmatpush2.bf16.msra.mxu0 %v520
    %564 = vmatprep.subr.bf16.mxu0 0
    %565 = vmatpush2.bf16.msra.mxu0 %v519
    %566 = vmatprep.subr.bf16.mxu0 0
    %567 = vmatpush2.bf16.msra.mxu0 %v518
    %568 = vmatprep.subr.bf16.mxu0 0
    %569 = vmatpush2.bf16.msra.mxu0 %v517
    %570 = vmatprep.subr.bf16.mxu0 0
    %571 = vmatpush2.bf16.msra.mxu0 %v516
    %572 = vmatprep.mubr.bf16.mxu0 %v411
    %573 = vmatmul.mubr.bf16.gmra.mxu0 %v410
    %v574 = vpop.f32.mrf.mxu0
    %v575 = vadd.f32 0.0, %v574
    %v576 = vpop.f32.mrf.mxu0
    %v577 = vpop.f32.mrf.mxu0
    %v578 = vadd.f32 0.0, %v577
    %v579 = vpop.f32.mrf.mxu0
    %580 = vdwg.mxu0
    %v581 = vadd.f32 %v408, %v575
    %v582 = vadd.f32 %v409, %v578
    %583 = vst [vmem:[#allocation3] sm:$0xff] %v581
    %584 = vst [vmem:[#allocation3 + $0x8] sm:$0xff] %v582
    // Predicated region
    $region50: #{tpu_custom_call.1} parent=1 // pred_check
      %p585 = pneg %p81
    $region51: #{tpu_custom_call.1} parent=1 // pred_check_branch
      %587 = sbr.rel (%p585) target = $region53
    $region52: #{tpu_custom_call.1} parent=1 // pred_region
      %v588 = vld [vmem:[#allocation3] sm:$0xff]
      %v589 = vld [vmem:[#allocation3 + $0x8] sm:$0xff]
      %v590 = vld [vmem:[%s6] sm:$0x1]
      %v592 = vlaneseq
      %v593 = vshrl.u32 %v592, 7
      %v594 = vsub.s32 0, %v593
      %v595 = vrot.slane %v590, %v594
      %v597 = vadd.f32 %v588, %v595
      %v598 = vadd.f32 %v589, %v595
      %599 = vst [vmem:[#allocation12] sm:$0xff] %v597
      %600 = vst [vmem:[#allocation12 + $0x8] sm:$0xff] %v598
    $region53: #{tpu_custom_call.1} parent=1 // pred_fallthru
      _
    // Predicated region
    $region54: #{tpu_custom_call.1} parent=1 // pred_check
      _
    $region55: #{tpu_custom_call.1} parent=1 // pred_check_branch
      %602 = sbr.rel (0) target = $region57
    $region56: #{tpu_custom_call.1} parent=1 // pred_region
      %s604 = ssub.s32 256, 256
      %605 = vsyncadd [#allocation6], %s604
      %s606 = sshll.u32 [#allocation12], 4
      %s607 = int_to_ptr.vmem [resolvable:$true] %s606
      %612 = dma.vmem_to_hbm [thread:$0]  %s607, 256, %s7, [#allocation6], 128, 128, 8
    $region57: #{tpu_custom_call.1} parent=1 // pred_fallthru
      _
    // Predicated region
    $region58: #{tpu_custom_call.1} parent=1 // pred_check
      _
    $region59: #{tpu_custom_call.1} parent=1 // pred_check_branch
      %614 = sbr.rel (0) target = $region61
    $region60: #{tpu_custom_call.1} parent=1 // pred_region
      %615 = dma.done [#allocation6], 256
    $region61: #{tpu_custom_call.1} parent=1 // pred_fallthru
      _
    %616 = vsyncpa [#allocation5], 1
    %617 = vsyncpa [#allocation8], 1
    %618 = vsyncpa [#allocation11], 1
    %619 = vsyncpa [#allocation6], 1

</llo_original>
